<compile_context>
chip_gen: v6e
topology: v6e:2x2x1
jax: 0.10.0
libtpu: 0.0.40
codegen_flags: <defaults>
</compile_context>

<pallas_src>
import numpy as np
import jax
import jax.numpy as jnp
from jax.experimental import pallas as pl
from jax.experimental.pallas import tpu as pltpu


# ---------------------------------------------------------------------------
# Window partition (matches the PyTorch gapleft/mid/gapright layout)
# ---------------------------------------------------------------------------

def _window_partition(seq_len: int, reduce_size: int):
    """0/1 indicator matrix W (R, S) and per-window sizes (R,)."""
    min_window = seq_len // reduce_size
    gap = seq_len - min_window * reduce_size
    gapleft = gap // 2
    gapright = gap // 2
    if gap % 2 == 1:
        gapleft += 1
    mid = reduce_size - gap
    sizes = ([min_window + 1] * gapleft
             + [min_window] * mid
             + [min_window + 1] * gapright)
    W = np.zeros((reduce_size, seq_len), dtype=np.float32)
    t = 0
    for w_idx, sz in enumerate(sizes):
        W[w_idx, t:t + sz] = 1.0
        t += sz
    assert t == seq_len
    return W, np.asarray(sizes, dtype=np.float32)


# ---------------------------------------------------------------------------
# Tiling / VMEM budgeting
# ---------------------------------------------------------------------------

_MIN_MEGACORE_STEPS = 4          # give v7x's 2 TCs something to shard
_DEFAULT_VMEM_CAP = 64 * 1024 * 1024   # conservative (v7x per-TC) fallback


def _vmem_capacity_bytes() -> int:
    try:
        return int(pltpu.get_tpu_info().vmem_capacity_bytes)
    except Exception:
        return _DEFAULT_VMEM_CAP


def _footprint_bytes(td, S, R, itemsize, getstd):
    """Conservative per-step scoped-VMEM estimate for the chosen feature tile."""
    fp = 2 * S * td * itemsize                       # double-buffered x tile
    if getstd:
        fp += 4 * S * td * 4                         # f32 temps: x, mean_b, diff, diff^2
    fp += (2 if getstd else 1) * 2 * R * td * itemsize   # double-buffered outputs
    fp += 2 * R * S * itemsize                       # W indicator
    if getstd:
        fp += 2 * S * R * 4                          # W^T (f32)
    fp += 2 * R * 4                                  # reciprocals
    fp += 1 << 20                                    # MXU staging / compiler scratch
    return fp


def _pick_feature_tile(d_pad, S, R, itemsize, getstd, block_budget, batch):
    """Largest multiple-of-128 feature tile dividing d_pad that fits the budget,
    keeps DMA rows >= 1 KiB, and (when possible) leaves >= 4 grid steps."""
    cands = [td for td in range(128, d_pad + 1, 128) if d_pad % td == 0]
    fitting = [td for td in cands
               if _footprint_bytes(td, S, R, itemsize, getstd) <= block_budget]
    if not fitting:
        # TODO(synk): for extremely long S, tile the sequence axis with f32
        # accumulators instead of shrinking the feature tile; fall back to the
        # minimum lane-aligned tile for correctness.
        return 128
    min_td = min(d_pad, max(128, -(-1024 // (128 * itemsize)) * 128))  # >=1 KiB rows
    pref = [td for td in fitting if td >= min_td] or fitting
    enough = [td for td in pref if batch * (d_pad // td) >= _MIN_MEGACORE_STEPS]
    return max(enough) if enough else max(pref)


# ---------------------------------------------------------------------------
# Kernels
# ---------------------------------------------------------------------------

def _mean_kernel(w_ref, inv_ref, x_ref, mean_ref):
    w = w_ref[...]                       # (R, S) 0/1 indicator in x dtype
    inv = inv_ref[...]                   # (R, 1) f32 reciprocals of window sizes
    x = x_ref[0]                         # (S, TD) native dtype (no upcast)
    sums = jnp.dot(w, x, preferred_element_type=jnp.float32)          # (R, TD)
    mean_ref[0] = (sums * inv).astype(mean_ref.dtype)


def _mean_std_kernel(w_ref, wt_ref, inv_ref, x_ref, mean_ref, std_ref):
    w = w_ref[...]                       # (R, S) 0/1 indicator in x dtype
    wt = wt_ref[...]                     # (S, R) 0/1 indicator, f32
    inv = inv_ref[...]                   # (R, 1) f32 reciprocals of window sizes
    x = x_ref[0]                         # (S, TD) native dtype
    xf = x.astype(jnp.float32)
    sums = jnp.dot(w, x, preferred_element_type=jnp.float32)          # (R, TD)
    mean = sums * inv                                                 # (R, TD) f32
    # Broadcast each window mean back to the sequence positions it covers.
    mean_b = jnp.dot(wt, mean, preferred_element_type=jnp.float32)    # (S, TD)
    diff = xf - mean_b
    sqsums = jnp.dot(w, diff * diff, preferred_element_type=jnp.float32)
    var = jnp.maximum(sqsums * inv, 0.0)                              # biased var
    mean_ref[0] = mean.astype(mean_ref.dtype)
    std_ref[0] = jnp.sqrt(var).astype(std_ref.dtype)


# ---------------------------------------------------------------------------
# Wrapper
# ---------------------------------------------------------------------------

def reduction_forward(x, mask=None, getstd=False, reduce_size=50):
    """Pallas equivalent of Reduction(reduce_size).forward(x, mask, getstd)."""
    # TODO(synk): non-None mask implies per-batch variable sequence lengths and
    # data-dependent window layouts; only the mask=None path is implemented.
    assert mask is None, "only mask=None is supported"
    B, S, D = x.shape
    R = reduce_size
    assert S >= R, "sequence length must be >= reduce_size"
    itemsize = jnp.dtype(x.dtype).itemsize

    # Pad feature dim to a lane-aligned multiple of 128 (sliced back at the end).
    d_pad = max(128, -(-D // 128) * 128)
    x_in = jnp.pad(x, ((0, 0), (0, 0), (0, d_pad - D))) if d_pad != D else x

    W_np, sizes_np = _window_partition(S, R)
    W = jnp.asarray(W_np, dtype=x.dtype)                        # 0/1, bf16-exact
    inv = jnp.asarray(1.0 / sizes_np, dtype=jnp.float32).reshape(R, 1)

    vmem_cap = _vmem_capacity_bytes()
    block_budget = int(vmem_cap * 0.75)                         # ~48 MiB v7x, ~96 MiB v5e/v6e
    TD = _pick_feature_tile(d_pad, S, R, itemsize, getstd, block_budget, B)
    nd = d_pad // TD
    grid = (B, nd)

    fp = _footprint_bytes(TD, S, R, itemsize, getstd)
    vmem_limit = int(min(max(fp + (4 << 20), 32 << 20), vmem_cap - (2 << 20)))

    cp = pltpu.CompilerParams(
        dimension_semantics=("parallel", "parallel"),
        vmem_limit_bytes=vmem_limit,
    )

    x_spec = pl.BlockSpec((1, S, TD), lambda b, d: (b, 0, d))
    w_spec = pl.BlockSpec((R, S), lambda b, d: (0, 0))
    inv_spec = pl.BlockSpec((R, 1), lambda b, d: (0, 0))
    out_spec = pl.BlockSpec((1, R, TD), lambda b, d: (b, 0, d))

    if getstd:
        Wt = jnp.asarray(W_np.T, dtype=jnp.float32)             # (S, R)
        wt_spec = pl.BlockSpec((S, R), lambda b, d: (0, 0))
        mean, std = pl.pallas_call(
            _mean_std_kernel,
            out_shape=(jax.ShapeDtypeStruct((B, R, d_pad), x.dtype),
                       jax.ShapeDtypeStruct((B, R, d_pad), x.dtype)),
            grid_spec=pltpu.PrefetchScalarGridSpec(
                num_scalar_prefetch=0,
                grid=grid,
                in_specs=[w_spec, wt_spec, inv_spec, x_spec],
                out_specs=[out_spec, out_spec],
            ),
            compiler_params=cp,
        )(W, Wt, inv, x_in)
        if d_pad != D:
            mean = mean[:, :, :D]
            std = std[:, :, :D]
        return mean, std

    mean = pl.pallas_call(
        _mean_kernel,
        out_shape=jax.ShapeDtypeStruct((B, R, d_pad), x.dtype),
        grid_spec=pltpu.PrefetchScalarGridSpec(
            num_scalar_prefetch=0,
            grid=grid,
            in_specs=[w_spec, inv_spec, x_spec],
            out_specs=out_spec,
        ),
        compiler_params=cp,
    )(W, inv, x_in)
    if d_pad != D:
        mean = mean[:, :, :D]
    return mean


# ---------------------------------------------------------------------------
# Pure-numpy reference mirroring the PyTorch slicing logic (mask=None)
# ---------------------------------------------------------------------------

def _reference(x_np, reduce_size):
    B, S, D = x_np.shape
    means, stds = [], []
    for i in range(B):
        seq = S
        mws = seq // reduce_size
        gap = seq - mws * reduce_size
        gapleft = gap // 2
        gapright = gap // 2
        if gap % 2 == 1:
            gapleft += 1
        mid = reduce_size - gap
        sizes = [mws + 1] * gapleft + [mws] * mid + [mws + 1] * gapright
        m_rows, s_rows = [], []
        t = 0
        for sz in sizes:
            seg = x_np[i, t:t + sz, :].astype(np.float64)
            t += sz
            m = seg.mean(axis=0)
            s = np.sqrt(((seg - m) ** 2).mean(axis=0))
            m_rows.append(m)
            s_rows.append(s)
        assert t == seq
        means.append(np.stack(m_rows))
        stds.append(np.stack(s_rows))
    return np.stack(means).astype(np.float32), np.stack(stds).astype(np.float32)


if __name__ == "__main__":
    # Small shapes consistent with the module: (batch, seq, dim).
    B, S, D = 2, 37, 128
    reduce_size = 10   # module default is 50, dim 1280; scaled down for the test

    key = jax.random.PRNGKey(0)
    k0, k1 = jax.random.split(key)
    # Non-zero mean so the std path is exercised where cancellation would hurt.
    x = jax.random.normal(k0, (B, S, D), dtype=jnp.float32) * 0.5 + 3.0

    # mean + std path
    mean, std = reduction_forward(x, mask=None, getstd=True,
                                  reduce_size=reduce_size)
    mean = jax.block_until_ready(mean)
    std = jax.block_until_ready(std)

    # mean-only fast path
    mean_only = jax.block_until_ready(
        reduction_forward(x, mask=None, getstd=False, reduce_size=reduce_size))

    ref_mean, ref_std = _reference(np.asarray(x), reduce_size)
    np.testing.assert_allclose(np.asarray(mean), ref_mean, rtol=1e-4, atol=1e-4)
    np.testing.assert_allclose(np.asarray(std), ref_std, rtol=1e-3, atol=1e-4)
    np.testing.assert_allclose(np.asarray(mean_only), ref_mean,
                               rtol=1e-4, atol=1e-4)

    # Non-lane-aligned D exercises the pad-to-128 path.
    B2, S2, D2, R2 = 2, 23, 96, 7
    x2 = jax.random.normal(k1, (B2, S2, D2), dtype=jnp.float32) + 1.0
    mean2, std2 = reduction_forward(x2, mask=None, getstd=True, reduce_size=R2)
    mean2 = jax.block_until_ready(mean2)
    std2 = jax.block_until_ready(std2)
    ref_mean2, ref_std2 = _reference(np.asarray(x2), R2)
    np.testing.assert_allclose(np.asarray(mean2), ref_mean2, rtol=1e-4, atol=1e-4)
    np.testing.assert_allclose(np.asarray(std2), ref_std2, rtol=1e-3, atol=1e-4)

    print("KERNEL_OK")
</pallas_src>

<mosaic_0001>
module attributes {stable_mosaic.version = 11 : i64} {
  func.func @_mean_std_kernel(%arg0: i32, %arg1: i32, %arg2: memref<10x37xf32, #tpu.memory_space<vmem>>, %arg3: memref<37x10xf32, #tpu.memory_space<vmem>>, %arg4: memref<10x1xf32, #tpu.memory_space<vmem>>, %arg5: memref<1x37x128xf32, #tpu.memory_space<vmem>>, %arg6: memref<1x10x128xf32, #tpu.memory_space<vmem>>, %arg7: memref<1x10x128xf32, #tpu.memory_space<vmem>>) attributes {dimension_semantics = [#tpu.dimension_semantics<parallel>, #tpu.dimension_semantics<parallel>], iteration_bounds = array<i64: 2, 1>, scalar_prefetch = 0 : i64, scratch_operands = 0 : i64, tpu.core_type = #tpu.core_type<tc>, window_params = [{pipeline_mode = #tpu.pipeline_mode<synchronous>, transform_indices = @transform_0, window_bounds = array<i64: 10, 37>}, {pipeline_mode = #tpu.pipeline_mode<synchronous>, transform_indices = @transform_1, window_bounds = array<i64: 37, 10>}, {pipeline_mode = #tpu.pipeline_mode<synchronous>, transform_indices = @transform_2, window_bounds = array<i64: 10, 1>}, {transform_indices = @transform_3, window_bounds = array<i64: 1, 37, 128>}, {transform_indices = @transform_4, window_bounds = array<i64: 1, 10, 128>}, {transform_indices = @transform_5, window_bounds = array<i64: 1, 10, 128>}]} {
    %c0 = arith.constant 0 : index
    %c0_0 = arith.constant 0 : index
    %0 = vector.load %arg2[%c0, %c0_0] : memref<10x37xf32, #tpu.memory_space<vmem>>, vector<10x37xf32>
    %c0_1 = arith.constant 0 : index
    %c0_2 = arith.constant 0 : index
    %1 = vector.load %arg3[%c0_1, %c0_2] : memref<37x10xf32, #tpu.memory_space<vmem>>, vector<37x10xf32>
    %c0_3 = arith.constant 0 : index
    %c0_4 = arith.constant 0 : index
    %2 = vector.load %arg4[%c0_3, %c0_4] : memref<10x1xf32, #tpu.memory_space<vmem>>, vector<10x1xf32>
    %c0_5 = arith.constant 0 : index
    %c0_6 = arith.constant 0 : index
    %c0_7 = arith.constant 0 : index
    %3 = vector.load %arg5[%c0_5, %c0_6, %c0_7] : memref<1x37x128xf32, #tpu.memory_space<vmem>>, vector<1x37x128xf32>
    %4 = vector.shape_cast %3 : vector<1x37x128xf32> to vector<37x128xf32>
    %cst = arith.constant dense<0.000000e+00> : vector<10x128xf32>
    %5 = tpu.matmul %0, %4, %cst {dimension_numbers = #tpu.dot_dimension_numbers<[1], [0], [0], [1], [0, 0, 1, 1], [], []>} : vector<10x37xf32>, vector<37x128xf32>, vector<10x128xf32> -> vector<10x128xf32>
    %6 = vector.broadcast %2 : vector<10x1xf32> to vector<10x128xf32>
    %7 = arith.mulf %5, %6 : vector<10x128xf32>
    %cst_8 = arith.constant dense<0.000000e+00> : vector<37x128xf32>
    %8 = tpu.matmul %1, %7, %cst_8 {dimension_numbers = #tpu.dot_dimension_numbers<[1], [0], [0], [1], [0, 0, 1, 1], [], []>} : vector<37x10xf32>, vector<10x128xf32>, vector<37x128xf32> -> vector<37x128xf32>
    %9 = arith.subf %4, %8 : vector<37x128xf32>
    %10 = arith.mulf %9, %9 : vector<37x128xf32>
    %cst_9 = arith.constant dense<0.000000e+00> : vector<10x128xf32>
    %11 = tpu.matmul %0, %10, %cst_9 {dimension_numbers = #tpu.dot_dimension_numbers<[1], [0], [0], [1], [0, 0, 1, 1], [], []>} : vector<10x37xf32>, vector<37x128xf32>, vector<10x128xf32> -> vector<10x128xf32>
    %12 = vector.broadcast %2 : vector<10x1xf32> to vector<10x128xf32>
    %13 = arith.mulf %11, %12 : vector<10x128xf32>
    %cst_10 = arith.constant 0.000000e+00 : f32
    %14 = vector.broadcast %cst_10 : f32 to vector<10x128xf32>
    %15 = arith.maximumf %13, %14 : vector<10x128xf32>
    %c0_11 = arith.constant 0 : index
    %c0_12 = arith.constant 0 : index
    %c0_13 = arith.constant 0 : index
    %16 = vector.load %arg6[%c0_11, %c0_12, %c0_13] : memref<1x10x128xf32, #tpu.memory_space<vmem>>, vector<1x10x128xf32>
    %17 = vector.shape_cast %16 : vector<1x10x128xf32> to vector<10x128xf32>
    %18 = vector.shape_cast %7 : vector<10x128xf32> to vector<1x10x128xf32>
    tpu.vector_store %arg6[%c0_11, %c0_12, %c0_13], %18 {strides = array<i32>} : memref<1x10x128xf32, #tpu.memory_space<vmem>>, vector<1x10x128xf32>,
    %19 = math.sqrt %15 : vector<10x128xf32>
    %c0_14 = arith.constant 0 : index
    %c0_15 = arith.constant 0 : index
    %c0_16 = arith.constant 0 : index
    %20 = vector.load %arg7[%c0_14, %c0_15, %c0_16] : memref<1x10x128xf32, #tpu.memory_space<vmem>>, vector<1x10x128xf32>
    %21 = vector.shape_cast %20 : vector<1x10x128xf32> to vector<10x128xf32>
    %22 = vector.shape_cast %19 : vector<10x128xf32> to vector<1x10x128xf32>
    tpu.vector_store %arg7[%c0_14, %c0_15, %c0_16], %22 {strides = array<i32>} : memref<1x10x128xf32, #tpu.memory_space<vmem>>, vector<1x10x128xf32>,
    return
  }
  func.func @transform_0(%arg0: i32, %arg1: i32) -> (i32, i32) {
    %c0_i32 = arith.constant 0 : i32
    %c0_i32_0 = arith.constant 0 : i32
    %c0_i32_1 = arith.constant 0 : i32
    return %c0_i32, %c0_i32_0 : i32, i32
  }
  func.func @transform_1(%arg0: i32, %arg1: i32) -> (i32, i32) {
    %c0_i32 = arith.constant 0 : i32
    %c0_i32_0 = arith.constant 0 : i32
    %c0_i32_1 = arith.constant 0 : i32
    return %c0_i32, %c0_i32_0 : i32, i32
  }
  func.func @transform_2(%arg0: i32, %arg1: i32) -> (i32, i32) {
    %c0_i32 = arith.constant 0 : i32
    %c0_i32_0 = arith.constant 0 : i32
    %c0_i32_1 = arith.constant 0 : i32
    return %c0_i32, %c0_i32_0 : i32, i32
  }
  func.func @transform_3(%arg0: i32, %arg1: i32) -> (i32, i32, i32) {
    %c0_i32 = arith.constant 0 : i32
    %c0_i32_0 = arith.constant 0 : i32
    return %arg0, %c0_i32, %arg1 : i32, i32, i32
  }
  func.func @transform_4(%arg0: i32, %arg1: i32) -> (i32, i32, i32) {
    %c0_i32 = arith.constant 0 : i32
    %c0_i32_0 = arith.constant 0 : i32
    return %arg0, %c0_i32, %arg1 : i32, i32, i32
  }
  func.func @transform_5(%arg0: i32, %arg1: i32) -> (i32, i32, i32) {
    %c0_i32 = arith.constant 0 : i32
    %c0_i32_0 = arith.constant 0 : i32
    return %arg0, %c0_i32, %arg1 : i32, i32, i32
  }
}

</mosaic_0001>

<llo_original>
// kernel: tpu_custom_call.1
$region0: #{tpu_custom_call.1}
  #allocation0 [shape = 'u32[]', space=smem, size = 0x4, offset = 0x4, fixed_abs, tag = 'smem constant byte address 0x4 - core index']
  #allocation1 [shape = 'u32[144,128]{1,0:T(1,128)}', space=vmem, size = 0x12000, scoped, tag = 'internal scratch']
  %s0 = inlined_call_operand.vmem [shape: f32[10,37], index: 0, kind: input, shape index: {}]
  %s1 = inlined_call_operand.vmem [shape: f32[37,10], index: 1, kind: input, shape index: {}]
  %s2 = inlined_call_operand.vmem [shape: f32[10,1], index: 2, kind: input, shape index: {}]
  %s3 = inlined_call_operand.vmem [shape: f32[2,37,128], index: 3, kind: input, shape index: {}]
  %s4 = inlined_call_operand.vmem [shape: f32[2,10,128], index: 4, kind: output, shape index: {0}]
  %s5 = inlined_call_operand.vmem [shape: f32[2,10,128], index: 5, kind: output, shape index: {1}]
  %6 = xla_tuple %s4, %s5
  %s7 = sld [smem:[#allocation0]]
  $region57: #{tpu_custom_call.1} parent=0
    _
  %s9 = ssub.s32 1, %s7
  %s10 = scalar_select 0, %s9, %s7
  loop: start=0, step=1, limit=4
  $region2: #{tpu_custom_call.1} parent=0 // loop_pre_header
    _
  $region3: #{tpu_custom_call.1} parent=0 // loop_header
    %s12 = sphi 0, %s16
    %p13 = scmp.ge.s32.totalorder %s12, 4
    %s19 = sphi 0, %s31
    %s20 = sphi 0, %s27
    %s21 = sphi 0, %s19
    %s22 = sphi 0, %s20
    %s23 = sphi 0, %s21
    %s24 = sphi 0, %s22
    %s32 = sphi 0, %s32
    %s34 = sphi 0, %s32
    %s35 = sphi 0, %s34
    %s49 = sphi 0, %s35
    %s53 = sphi 0, %s53
    %s55 = sphi 0, %s53
    %s56 = sphi 0, %s55
    %s70 = sphi 0, %s56
    %s74 = sphi 0, %s74
    %s76 = sphi 0, %s74
    %s77 = sphi 0, %s76
    %s91 = sphi 0, %s77
    %s99 = sphi 0, %s101
    %s102 = sphi 0, %s99
    %s103 = sphi 0, %s102
    %s119 = sphi 0, %s103
    %s127 = sphi 0, %s129
    %s130 = sphi 0, %s127
    %s131 = sphi 0, %s130
    %s147 = sphi 0, %s131
    %s155 = sphi 0, %s157
    %s158 = sphi 0, %s155
    %s159 = sphi 0, %s158
    %s175 = sphi 0, %s159
  $region4: #{tpu_custom_call.1} parent=0 // loop_header_branch
    %15 = sbr.rel (%p13) target = $region8
  $region5: #{tpu_custom_call.1} parent=0 // loop_body
    %s17 = ssub.s32 %s12, 1
    %s18 = ssub.s32 %s12, 2
    %s25 = sadd.s32 1, %s20
    %p26 = scmp.ge.s32.totalorder %s25, 1
    %s27 = scalar_select %p26, 0, %s25
    %s28 = sadd.s32 1, %s19
    %s29 = scalar_select %p26, %s28, %s19
    %p30 = scmp.ge.s32.totalorder %s29, 2
    %s31 = scalar_select %p30, 0, %s29
    %s33 = sadd.s32 %s32, 1
    %p36 = scmp.eq.s32.totalorder %s12, 1
    %p37 = scmp.ne.s32.totalorder %s32, %s34
    %p38 = scmp.eq.s32.totalorder %s12, 0
    %p39 = por %p37, %p38
    %p40 = scmp.ne.s32.totalorder %s32, %s34
    %p41 = scmp.eq.s32.totalorder %s17, 1
    %p42 = por %p40, %p41
    %p43 = scmp.ne.s32.totalorder %s34, %s35
    %p44 = scmp.eq.s32.totalorder %s17, 0
    %p45 = por %p43, %p44
    %p46 = scmp.ne.s32.totalorder %s34, %s35
    %p47 = scmp.eq.s32.totalorder %s18, 1
    %p48 = por %p46, %p47
    %p50 = scmp.ne.s32.totalorder %s35, %s49
    %p51 = scmp.eq.s32.totalorder %s18, 0
    %p52 = por %p50, %p51
    %s54 = sadd.s32 %s53, 1
    %p57 = scmp.eq.s32.totalorder %s12, 1
    %p58 = scmp.ne.s32.totalorder %s53, %s55
    %p59 = scmp.eq.s32.totalorder %s12, 0
    %p60 = por %p58, %p59
    %p61 = scmp.ne.s32.totalorder %s53, %s55
    %p62 = scmp.eq.s32.totalorder %s17, 1
    %p63 = por %p61, %p62
    %p64 = scmp.ne.s32.totalorder %s55, %s56
    %p65 = scmp.eq.s32.totalorder %s17, 0
    %p66 = por %p64, %p65
    %p67 = scmp.ne.s32.totalorder %s55, %s56
    %p68 = scmp.eq.s32.totalorder %s18, 1
    %p69 = por %p67, %p68
    %p71 = scmp.ne.s32.totalorder %s56, %s70
    %p72 = scmp.eq.s32.totalorder %s18, 0
    %p73 = por %p71, %p72
    %s75 = sadd.s32 %s74, 1
    %p78 = scmp.eq.s32.totalorder %s12, 1
    %p79 = scmp.ne.s32.totalorder %s74, %s76
    %p80 = scmp.eq.s32.totalorder %s12, 0
    %p81 = por %p79, %p80
    %p82 = scmp.ne.s32.totalorder %s74, %s76
    %p83 = scmp.eq.s32.totalorder %s17, 1
    %p84 = por %p82, %p83
    %p85 = scmp.ne.s32.totalorder %s76, %s77
    %p86 = scmp.eq.s32.totalorder %s17, 0
    %p87 = por %p85, %p86
    %p88 = scmp.ne.s32.totalorder %s76, %s77
    %p89 = scmp.eq.s32.totalorder %s18, 1
    %p90 = por %p88, %p89
    %p92 = scmp.ne.s32.totalorder %s77, %s91
    %p93 = scmp.eq.s32.totalorder %s18, 0
    %p94 = por %p92, %p93
    %s95 = ssub.s32 %s19, %s31
    %s96 = ssub.s32 %s20, %s27
    %s97 = sor.u32 %s95, %s96
    %p98 = scmp.eq.s32.totalorder %s97, 0
    %s100 = sadd.s32 %s99, 1
    %s101 = scalar_select %p98, %s99, %s100
    %p104 = pneg %p98
    %p105 = scmp.eq.s32.totalorder %s12, 1
    %p106 = por %p104, %p105
    %p107 = scmp.ne.s32.totalorder %s99, %s102
    %p108 = scmp.eq.s32.totalorder %s12, 0
    %p109 = por %p107, %p108
    %p110 = scmp.ne.s32.totalorder %s99, %s102
    %p111 = scmp.eq.s32.totalorder %s17, 1
    %p112 = por %p110, %p111
    %p113 = scmp.ne.s32.totalorder %s102, %s103
    %p114 = scmp.eq.s32.totalorder %s17, 0
    %p115 = por %p113, %p114
    %p116 = scmp.ne.s32.totalorder %s102, %s103
    %p117 = scmp.eq.s32.totalorder %s18, 1
    %p118 = por %p116, %p117
    %p120 = scmp.ne.s32.totalorder %s103, %s119
    %p121 = scmp.eq.s32.totalorder %s18, 0
    %p122 = por %p120, %p121
    %s123 = ssub.s32 %s19, %s31
    %s124 = ssub.s32 %s20, %s27
    %s125 = sor.u32 %s123, %s124
    %p126 = scmp.eq.s32.totalorder %s125, 0
    %s128 = sadd.s32 %s127, 1
    %s129 = scalar_select %p126, %s127, %s128
    %p132 = pneg %p126
    %p133 = scmp.eq.s32.totalorder %s12, 1
    %p134 = por %p132, %p133
    %p135 = scmp.ne.s32.totalorder %s127, %s130
    %p136 = scmp.eq.s32.totalorder %s12, 0
    %p137 = por %p135, %p136
    %p138 = scmp.ne.s32.totalorder %s127, %s130
    %p139 = scmp.eq.s32.totalorder %s17, 1
    %p140 = por %p138, %p139
    %p141 = scmp.ne.s32.totalorder %s130, %s131
    %p142 = scmp.eq.s32.totalorder %s17, 0
    %p143 = por %p141, %p142
    %p144 = scmp.ne.s32.totalorder %s130, %s131
    %p145 = scmp.eq.s32.totalorder %s18, 1
    %p146 = por %p144, %p145
    %p148 = scmp.ne.s32.totalorder %s131, %s147
    %p149 = scmp.eq.s32.totalorder %s18, 0
    %p150 = por %p148, %p149
    %s151 = ssub.s32 %s19, %s31
    %s152 = ssub.s32 %s20, %s27
    %s153 = sor.u32 %s151, %s152
    %p154 = scmp.eq.s32.totalorder %s153, 0
    %s156 = sadd.s32 %s155, 1
    %s157 = scalar_select %p154, %s155, %s156
    %p160 = pneg %p154
    %p161 = scmp.eq.s32.totalorder %s12, 1
    %p162 = por %p160, %p161
    %p163 = scmp.ne.s32.totalorder %s155, %s158
    %p164 = scmp.eq.s32.totalorder %s12, 0
    %p165 = por %p163, %p164
    %p166 = scmp.ne.s32.totalorder %s155, %s158
    %p167 = scmp.eq.s32.totalorder %s17, 1
    %p168 = por %p166, %p167
    %p169 = scmp.ne.s32.totalorder %s158, %s159
    %p170 = scmp.eq.s32.totalorder %s17, 0
    %p171 = por %p169, %p170
    %p172 = scmp.ne.s32.totalorder %s158, %s159
    %p173 = scmp.eq.s32.totalorder %s18, 1
    %p174 = por %p172, %p173
    %p176 = scmp.ne.s32.totalorder %s159, %s175
    %p177 = scmp.eq.s32.totalorder %s18, 0
    %p178 = por %p176, %p177
    %p179 = scmp.le.s32.totalorder 1, %s12
    %p180 = scmp.lt.s32.totalorder %s12, 3
    %p181 = pnand %p179, %p180
    %p182 = pneg %p181
    // Predicated region
    $region9: #{tpu_custom_call.1} parent=5 // pred_check
      _
    $region10: #{tpu_custom_call.1} parent=5 // pred_check_branch
      %184 = sbr.rel (%p181) target = $region12
    $region11: #{tpu_custom_call.1} parent=5 // pred_region
      %s185 = ssub.s32 %s12, 1
      // Predicated region
      $region13: #{tpu_custom_call.1} parent=11 // pred_check
        %p186 = pneg %p45
      $region14: #{tpu_custom_call.1} parent=11 // pred_check_branch
        %188 = sbr.rel (%p186) target = $region16
      $region15: #{tpu_custom_call.1} parent=11 // pred_region
        _
      $region16: #{tpu_custom_call.1} parent=11 // pred_fallthru
        _
      // Predicated region
      $region17: #{tpu_custom_call.1} parent=11 // pred_check
        %p189 = pneg %p66
      $region18: #{tpu_custom_call.1} parent=11 // pred_check_branch
        %191 = sbr.rel (%p189) target = $region20
      $region19: #{tpu_custom_call.1} parent=11 // pred_region
        _
      $region20: #{tpu_custom_call.1} parent=11 // pred_fallthru
        _
      // Predicated region
      $region21: #{tpu_custom_call.1} parent=11 // pred_check
        %p192 = pneg %p87
      $region22: #{tpu_custom_call.1} parent=11 // pred_check_branch
        %194 = sbr.rel (%p192) target = $region24
      $region23: #{tpu_custom_call.1} parent=11 // pred_region
        _
      $region24: #{tpu_custom_call.1} parent=11 // pred_fallthru
        _
    $region12: #{tpu_custom_call.1} parent=5 // pred_fallthru
      _
    %p195 = scmp.lt.s32.totalorder %s12, 2
    // Predicated region
    $region25: #{tpu_custom_call.1} parent=5 // pred_check
      %p196 = pneg %p195
    $region26: #{tpu_custom_call.1} parent=5 // pred_check_branch
      %198 = sbr.rel (%p196) target = $region28
    $region27: #{tpu_custom_call.1} parent=5 // pred_region
      // Predicated region
      $region29: #{tpu_custom_call.1} parent=27 // pred_check
        %p199 = pneg %p109
      $region30: #{tpu_custom_call.1} parent=27 // pred_check_branch
        %201 = sbr.rel (%p199) target = $region32
      $region31: #{tpu_custom_call.1} parent=27 // pred_region
        %p202 = scmp.lt.s32.totalorder %s19, 1
        %s203 = scalar_select %p202, %s19, 1
        %p204 = scmp.lt.s32.totalorder %s20, 0
        %s205 = scalar_select %p204, %s20, 0
        %s206 = smul.addr %s203, 5
        %s207 = sadd.s32 %s205, %s206
        %s208 = smul.addr %s207, 8
        %s209 = scalar_lea.vmem %s3, %s208
      $region32: #{tpu_custom_call.1} parent=27 // pred_fallthru
        _
    $region28: #{tpu_custom_call.1} parent=5 // pred_fallthru
      _
    %p210 = scmp.le.s32.totalorder 1, %s12
    %p211 = scmp.lt.s32.totalorder %s12, 3
    %p212 = pnand %p210, %p211
    %p213 = pneg %p212
    // Predicated region
    $region33: #{tpu_custom_call.1} parent=5 // pred_check
      _
    $region34: #{tpu_custom_call.1} parent=5 // pred_check_branch
      %215 = sbr.rel (%p212) target = $region36
    $region35: #{tpu_custom_call.1} parent=5 // pred_region
      %s216 = ssub.s32 %s12, 1
      %p217 = pneg %p45
      %p218 = pneg %p42
      %p219 = pneg %p66
      %p220 = pneg %p63
      %p221 = pneg %p87
      %p222 = pneg %p84
      %p223 = scmp.lt.s32.totalorder %s21, 1
      %s224 = scalar_select %p223, %s21, 1
      %p225 = scmp.lt.s32.totalorder %s22, 0
      %s226 = scalar_select %p225, %s22, 0
      %s227 = smul.addr %s224, 5
      %s228 = sadd.s32 %s226, %s227
      %s229 = smul.addr %s228, 8
      %s230 = scalar_lea.vmem %s3, %s229
      %p231 = pneg %p115
      %p232 = pneg %p112
      %p233 = pneg %p143
      %p234 = pneg %p140
      %p235 = scmp.lt.s32.totalorder %s21, 1
      %s236 = scalar_select %p235, %s21, 1
      %p237 = scmp.lt.s32.totalorder %s22, 0
      %s238 = scalar_select %p237, %s22, 0
      %s239 = smul.addr %s236, 2
      %s240 = sadd.s32 %s238, %s239
      %s241 = smul.addr %s240, 8
      %s242 = scalar_lea.vmem %s4, %s241
      %p243 = pneg %p171
      %p244 = pneg %p168
      %p245 = scmp.lt.s32.totalorder %s21, 1
      %s246 = scalar_select %p245, %s21, 1
      %p247 = scmp.lt.s32.totalorder %s22, 0
      %s248 = scalar_select %p247, %s22, 0
      %s249 = smul.addr %s246, 2
      %s250 = sadd.s32 %s248, %s249
      %s251 = smul.addr %s250, 8
      %s252 = scalar_lea.vmem %s5, %s251
      %p253 = scmp.lt.s32.totalorder %s21, 1
      %s254 = scalar_select %p253, %s21, 1
      %p255 = scmp.lt.s32.totalorder %s22, 0
      %s256 = scalar_select %p255, %s22, 0
      %s257 = smul.addr %s254, 5
      %s258 = sadd.s32 %s256, %s257
      %s259 = smul.addr %s258, 8
      %s260 = scalar_lea.vmem %s3, %s259
      %p261 = scmp.lt.s32.totalorder %s21, 1
      %s262 = scalar_select %p261, %s21, 1
      %p263 = scmp.lt.s32.totalorder %s22, 0
      %s264 = scalar_select %p263, %s22, 0
      %s265 = smul.addr %s262, 2
      %s266 = sadd.s32 %s264, %s265
      %s267 = smul.addr %s266, 8
      %s268 = scalar_lea.vmem %s4, %s267
      %p269 = scmp.lt.s32.totalorder %s21, 1
      %s270 = scalar_select %p269, %s21, 1
      %p271 = scmp.lt.s32.totalorder %s22, 0
      %s272 = scalar_select %p271, %s22, 0
      %s273 = smul.addr %s270, 2
      %s274 = sadd.s32 %s272, %s273
      %s275 = smul.addr %s274, 8
      %s276 = scalar_lea.vmem %s5, %s275
      %v277 = vld [vmem:[%s0] sm:$0xff]
      %v278 = vld [vmem:[%s0 + $0x8] sm:$0x3]
      %v279 = vld [vmem:[%s1] sm:$0xff]
      %v280 = vld [vmem:[%s1 + $0x8] sm:$0xff]
      %v281 = vld [vmem:[%s1 + $0x10] sm:$0xff]
      %v282 = vld [vmem:[%s1 + $0x18] sm:$0xff]
      %v283 = vld [vmem:[%s1 + $0x20] sm:$0x1f]
      %v284 = vld [vmem:[%s2] sm:$0xff]
      %v285 = vld [vmem:[%s2 + $0x8] sm:$0x3]
      %v286 = vld [vmem:[%s260] sm:$0xff]
      %v287 = vld [vmem:[%s260 + $0x8] sm:$0xff]
      %v288 = vld [vmem:[%s260 + $0x10] sm:$0xff]
      %v289 = vld [vmem:[%s260 + $0x18] sm:$0xff]
      %v290 = vld [vmem:[%s260 + $0x20] sm:$0x1f]
      %vm291 = vcmask 302080
      %v293 = vsel %vm291, %v277, 0
      %v296 = vsel %vm291, %v278, 0
      %vm298 = vcmask 1044480
      %v300 = vsel %vm298, %v290, 0
      %302 = vmatprep.subr.mxu0 0.0
      %303 = vmatpush1.msra.mxu0 0.0
      %304 = vmatprep.subr.mxu0 0.0
      %305 = vmatpush1.msra.mxu0 0.0
      %306 = vmatprep.subr.mxu0 0.0
      %307 = vmatpush1.msra.mxu0 0.0
      %308 = vmatprep.subr.mxu0 0.0
      %309 = vmatpush1.msra.mxu0 0.0
      %310 = vmatprep.subr.mxu0 0.0
      %311 = vmatpush1.msra.mxu0 0.0
      %312 = vmatprep.subr.mxu0 0.0
      %313 = vmatpush1.msra.mxu0 0.0
      %314 = vmatprep.subr.mxu0 0.0
      %315 = vmatpush1.msra.mxu0 0.0
      %316 = vmatprep.subr.mxu0 0.0
      %317 = vmatpush1.msra.mxu0 0.0
      %318 = vmatprep.subr.mxu0 0.0
      %319 = vmatpush1.msra.mxu0 0.0
      %320 = vmatprep.subr.mxu0 0.0
      %321 = vmatpush1.msra.mxu0 0.0
      %322 = vmatprep.subr.mxu0 0.0
      %323 = vmatpush1.msra.mxu0 0.0
      %324 = vmatprep.subr.mxu0 0.0
      %325 = vmatpush1.msra.mxu0 %v300
      %326 = vmatprep.subr.mxu0 0.0
      %327 = vmatpush1.msra.mxu0 %v289
      %328 = vmatprep.subr.mxu0 0.0
      %329 = vmatpush1.msra.mxu0 %v288
      %330 = vmatprep.subr.mxu0 0.0
      %331 = vmatpush1.msra.mxu0 %v287
      %332 = vmatprep.subr.mxu0 0.0
      %333 = vmatpush1.msra.mxu0 %v286
      %334 = vmatprep.subr.mxu0 0.0
      %335 = vmatpush2.msra.mxu0 0.0
      %336 = vmatprep.subr.mxu0 0.0
      %337 = vmatpush2.msra.mxu0 0.0
      %338 = vmatprep.subr.mxu0 0.0
      %339 = vmatpush2.msra.mxu0 0.0
      %340 = vmatprep.subr.mxu0 0.0
      %341 = vmatpush2.msra.mxu0 0.0
      %342 = vmatprep.subr.mxu0 0.0
      %343 = vmatpush2.msra.mxu0 0.0
      %344 = vmatprep.subr.mxu0 0.0
      %345 = vmatpush2.msra.mxu0 0.0
      %346 = vmatprep.subr.mxu0 0.0
      %347 = vmatpush2.msra.mxu0 0.0
      %348 = vmatprep.subr.mxu0 0.0
      %349 = vmatpush2.msra.mxu0 0.0
      %350 = vmatprep.subr.mxu0 0.0
      %351 = vmatpush2.msra.mxu0 0.0
      %352 = vmatprep.subr.mxu0 0.0
      %353 = vmatpush2.msra.mxu0 0.0
      %354 = vmatprep.subr.mxu0 0.0
      %355 = vmatpush2.msra.mxu0 0.0
      %356 = vmatprep.subr.mxu0 0.0
      %357 = vmatpush2.msra.mxu0 0.0
      %358 = vmatprep.subr.mxu0 0.0
      %359 = vmatpush2.msra.mxu0 0.0
      %360 = vmatprep.subr.mxu0 0.0
      %361 = vmatpush2.msra.mxu0 0.0
      %362 = vmatprep.subr.mxu0 0.0
      %363 = vmatpush2.msra.mxu0 0.0
      %364 = vmatprep.subr.mxu0 0.0
      %365 = vmatpush2.msra.mxu0 0.0
      %366 = vmatprep.mubr.f32.mxu0 0.0
      %367 = vmatmul.mubr.f32.gmra.mxu0 %v293
      %v368 = vpop.f32.mrf.mxu0
      %v369 = vadd.f32 0.0, %v368
      %v370 = vpop.f32.mrf.mxu0
      %371 = vmatprep.mubr.f32.mxu0 0.0
      %372 = vmatmul.mubr.f32.gmra.mxu0 %v296
      %v373 = vpop.f32.mrf.mxu0
      %v374 = vadd.f32 0.0, %v373
      %v375 = vpop.f32.mrf.mxu0
      %376 = vdwg.mxu0
      %378 = vset.pattern.permute.xlu0 0
      %379 = vperm.xlu0 %378, %v284
      %v380 = vpop.permute.xlu0 %379
      %383 = vset.pattern.permute.xlu0 0
      %384 = vperm.xlu0 %383, %v285
      %v385 = vpop.permute.xlu0 %384
      %v387 = vmul.f32 %v369, %v380
      %v388 = vmul.f32 %v374, %v385
      %vm389 = vcmask 80896
      %v391 = vsel %vm389, %v279, 0
      %v394 = vsel %vm389, %v280, 0
      %v397 = vsel %vm389, %v281, 0
      %v400 = vsel %vm389, %v282, 0
      %v403 = vsel %vm389, %v283, 0
      %vm405 = vcmask 1041408
      %v407 = vsel %vm405, %v388, 0
      %409 = vmatprep.subr.mxu0 0.0
      %410 = vmatpush1.msra.mxu0 0.0
      %411 = vmatprep.subr.mxu0 0.0
      %412 = vmatpush1.msra.mxu0 0.0
      %413 = vmatprep.subr.mxu0 0.0
      %414 = vmatpush1.msra.mxu0 0.0
      %415 = vmatprep.subr.mxu0 0.0
      %416 = vmatpush1.msra.mxu0 0.0
      %417 = vmatprep.subr.mxu0 0.0
      %418 = vmatpush1.msra.mxu0 0.0
      %419 = vmatprep.subr.mxu0 0.0
      %420 = vmatpush1.msra.mxu0 0.0
      %421 = vmatprep.subr.mxu0 0.0
      %422 = vmatpush1.msra.mxu0 0.0
      %423 = vmatprep.subr.mxu0 0.0
      %424 = vmatpush1.msra.mxu0 0.0
      %425 = vmatprep.subr.mxu0 0.0
      %426 = vmatpush1.msra.mxu0 0.0
      %427 = vmatprep.subr.mxu0 0.0
      %428 = vmatpush1.msra.mxu0 0.0
      %429 = vmatprep.subr.mxu0 0.0
      %430 = vmatpush1.msra.mxu0 0.0
      %431 = vmatprep.subr.mxu0 0.0
      %432 = vmatpush1.msra.mxu0 0.0
      %433 = vmatprep.subr.mxu0 0.0
      %434 = vmatpush1.msra.mxu0 0.0
      %435 = vmatprep.subr.mxu0 0.0
      %436 = vmatpush1.msra.mxu0 0.0
      %437 = vmatprep.subr.mxu0 0.0
      %438 = vmatpush1.msra.mxu0 %v407
      %439 = vmatprep.subr.mxu0 0.0
      %440 = vmatpush1.msra.mxu0 %v387
      %441 = vmatprep.subr.mxu0 0.0
      %442 = vmatpush2.msra.mxu0 0.0
      %443 = vmatprep.subr.mxu0 0.0
      %444 = vmatpush2.msra.mxu0 0.0
      %445 = vmatprep.subr.mxu0 0.0
      %446 = vmatpush2.msra.mxu0 0.0
      %447 = vmatprep.subr.mxu0 0.0
      %448 = vmatpush2.msra.mxu0 0.0
      %449 = vmatprep.subr.mxu0 0.0
      %450 = vmatpush2.msra.mxu0 0.0
      %451 = vmatprep.subr.mxu0 0.0
      %452 = vmatpush2.msra.mxu0 0.0
      %453 = vmatprep.subr.mxu0 0.0
      %454 = vmatpush2.msra.mxu0 0.0
      %455 = vmatprep.subr.mxu0 0.0
      %456 = vmatpush2.msra.mxu0 0.0
      %457 = vmatprep.subr.mxu0 0.0
      %458 = vmatpush2.msra.mxu0 0.0
      %459 = vmatprep.subr.mxu0 0.0
      %460 = vmatpush2.msra.mxu0 0.0
      %461 = vmatprep.subr.mxu0 0.0
      %462 = vmatpush2.msra.mxu0 0.0
      %463 = vmatprep.subr.mxu0 0.0
      %464 = vmatpush2.msra.mxu0 0.0
      %465 = vmatprep.subr.mxu0 0.0
      %466 = vmatpush2.msra.mxu0 0.0
      %467 = vmatprep.subr.mxu0 0.0
      %468 = vmatpush2.msra.mxu0 0.0
      %469 = vmatprep.subr.mxu0 0.0
      %470 = vmatpush2.msra.mxu0 0.0
      %471 = vmatprep.subr.mxu0 0.0
      %472 = vmatpush2.msra.mxu0 0.0
      %473 = vmatprep.mubr.f32.mxu0 0.0
      %474 = vmatmul.mubr.f32.gmra.mxu0 %v391
      %v475 = vpop.f32.mrf.mxu0
      %v476 = vadd.f32 0.0, %v475
      %v477 = vpop.f32.mrf.mxu0
      %478 = vmatprep.mubr.f32.mxu0 0.0
      %479 = vmatmul.mubr.f32.gmra.mxu0 %v394
      %v480 = vpop.f32.mrf.mxu0
      %v481 = vadd.f32 0.0, %v480
      %v482 = vpop.f32.mrf.mxu0
      %483 = vmatprep.mubr.f32.mxu0 0.0
      %484 = vmatmul.mubr.f32.gmra.mxu0 %v397
      %v485 = vpop.f32.mrf.mxu0
      %v486 = vadd.f32 0.0, %v485
      %v487 = vpop.f32.mrf.mxu0
      %488 = vmatprep.mubr.f32.mxu0 0.0
      %489 = vmatmul.mubr.f32.gmra.mxu0 %v400
      %v490 = vpop.f32.mrf.mxu0
      %v491 = vadd.f32 0.0, %v490
      %v492 = vpop.f32.mrf.mxu0
      %493 = vmatprep.mubr.f32.mxu0 0.0
      %494 = vmatmul.mubr.f32.gmra.mxu0 %v403
      %v495 = vpop.f32.mrf.mxu0
      %v496 = vadd.f32 0.0, %v495
      %v497 = vpop.f32.mrf.mxu0
      %498 = vdwg.mxu0
      %v499 = vsub.f32 %v286, %v476
      %v500 = vsub.f32 %v287, %v481
      %v501 = vsub.f32 %v288, %v486
      %v502 = vsub.f32 %v289, %v491
      %v503 = vsub.f32 %v290, %v496
      %v504 = vmul.f32 %v499, %v499
      %v505 = vmul.f32 %v500, %v500
      %v506 = vmul.f32 %v501, %v501
      %v507 = vmul.f32 %v502, %v502
      %v508 = vmul.f32 %v503, %v503
      %v510 = vsel %vm298, %v508, 0
      %512 = vmatprep.subr.mxu0 0.0
      %513 = vmatpush1.msra.mxu0 0.0
      %514 = vmatprep.subr.mxu0 0.0
      %515 = vmatpush1.msra.mxu0 0.0
      %516 = vmatprep.subr.mxu0 0.0
      %517 = vmatpush1.msra.mxu0 0.0
      %518 = vmatprep.subr.mxu0 0.0
      %519 = vmatpush1.msra.mxu0 0.0
      %520 = vmatprep.subr.mxu0 0.0
      %521 = vmatpush1.msra.mxu0 0.0
      %522 = vmatprep.subr.mxu0 0.0
      %523 = vmatpush1.msra.mxu0 0.0
      %524 = vmatprep.subr.mxu0 0.0
      %525 = vmatpush1.msra.mxu0 0.0
      %526 = vmatprep.subr.mxu0 0.0
      %527 = vmatpush1.msra.mxu0 0.0
      %528 = vmatprep.subr.mxu0 0.0
      %529 = vmatpush1.msra.mxu0 0.0
      %530 = vmatprep.subr.mxu0 0.0
      %531 = vmatpush1.msra.mxu0 0.0
      %532 = vmatprep.subr.mxu0 0.0
      %533 = vmatpush1.msra.mxu0 0.0
      %534 = vmatprep.subr.mxu0 0.0
      %535 = vmatpush1.msra.mxu0 %v510
      %536 = vmatprep.subr.mxu0 0.0
      %537 = vmatpush1.msra.mxu0 %v507
      %538 = vmatprep.subr.mxu0 0.0
      %539 = vmatpush1.msra.mxu0 %v506
      %540 = vmatprep.subr.mxu0 0.0
      %541 = vmatpush1.msra.mxu0 %v505
      %542 = vmatprep.subr.mxu0 0.0
      %543 = vmatpush1.msra.mxu0 %v504
      %544 = vmatprep.subr.mxu0 0.0
      %545 = vmatpush2.msra.mxu0 0.0
      %546 = vmatprep.subr.mxu0 0.0
      %547 = vmatpush2.msra.mxu0 0.0
      %548 = vmatprep.subr.mxu0 0.0
      %549 = vmatpush2.msra.mxu0 0.0
      %550 = vmatprep.subr.mxu0 0.0
      %551 = vmatpush2.msra.mxu0 0.0
      %552 = vmatprep.subr.mxu0 0.0
      %553 = vmatpush2.msra.mxu0 0.0
      %554 = vmatprep.subr.mxu0 0.0
      %555 = vmatpush2.msra.mxu0 0.0
      %556 = vmatprep.subr.mxu0 0.0
      %557 = vmatpush2.msra.mxu0 0.0
      %558 = vmatprep.subr.mxu0 0.0
      %559 = vmatpush2.msra.mxu0 0.0
      %560 = vmatprep.subr.mxu0 0.0
      %561 = vmatpush2.msra.mxu0 0.0
      %562 = vmatprep.subr.mxu0 0.0
      %563 = vmatpush2.msra.mxu0 0.0
      %564 = vmatprep.subr.mxu0 0.0
      %565 = vmatpush2.msra.mxu0 0.0
      %566 = vmatprep.subr.mxu0 0.0
      %567 = vmatpush2.msra.mxu0 0.0
      %568 = vmatprep.subr.mxu0 0.0
      %569 = vmatpush2.msra.mxu0 0.0
      %570 = vmatprep.subr.mxu0 0.0
      %571 = vmatpush2.msra.mxu0 0.0
      %572 = vmatprep.subr.mxu0 0.0
      %573 = vmatpush2.msra.mxu0 0.0
      %574 = vmatprep.subr.mxu0 0.0
      %575 = vmatpush2.msra.mxu0 0.0
      %576 = vmatprep.mubr.f32.mxu0 0.0
      %577 = vmatmul.mubr.f32.gmra.mxu0 %v293
      %v578 = vpop.f32.mrf.mxu0
      %v579 = vadd.f32 0.0, %v578
      %v580 = vpop.f32.mrf.mxu0
      %581 = vmatprep.mubr.f32.mxu0 0.0
      %582 = vmatmul.mubr.f32.gmra.mxu0 %v296
      %v583 = vpop.f32.mrf.mxu0
      %v584 = vadd.f32 0.0, %v583
      %v585 = vpop.f32.mrf.mxu0
      %586 = vdwg.mxu0
      %v587 = vmul.f32 %v579, %v380
      %v588 = vmul.f32 %v584, %v385
      %v589 = vmax.f32 %v587, 0.0
      %v590 = vmax.f32 %v588, 0.0
      %591 = vst [vmem:[%s268] sm:$0xff] %v387
      %592 = vst [vmem:[%s268 + $0x8] sm:$0x3] %v388
      %v593 = vrsqrt.pop %v589
      %v594 = vmul.f32 %v589, %v593
      %vm595 = vcmp.eq.f32.partialorder %v589, inf
      %v596 = vsel %vm595, %v589, %v594
      %vm597 = vcmp.eq.f32.partialorder %v589, 0.0
      %v598 = vand.u32 %v589, 2147483648
      %v599 = vsel %vm597, %v598, %v596
      %v600 = vrsqrt.pop %v590
      %v601 = vmul.f32 %v590, %v600
      %vm602 = vcmp.eq.f32.partialorder %v590, inf
      %v603 = vsel %vm602, %v590, %v601
      %vm604 = vcmp.eq.f32.partialorder %v590, 0.0
      %v605 = vand.u32 %v590, 2147483648
      %v606 = vsel %vm604, %v605, %v603
      %607 = vst [vmem:[%s276] sm:$0xff] %v599
      %608 = vst [vmem:[%s276 + $0x8] sm:$0x3] %v606
      %p609 = scmp.lt.s32.totalorder %s21, 1
      %s610 = scalar_select %p609, %s21, 1
      %p611 = scmp.lt.s32.totalorder %s22, 0
      %s612 = scalar_select %p611, %s22, 0
      %s613 = smul.addr %s610, 2
      %s614 = sadd.s32 %s612, %s613
      %s615 = smul.addr %s614, 8
      %s616 = scalar_lea.vmem %s4, %s615
      %p617 = scmp.lt.s32.totalorder %s21, 1
      %s618 = scalar_select %p617, %s21, 1
      %p619 = scmp.lt.s32.totalorder %s22, 0
      %s620 = scalar_select %p619, %s22, 0
      %s621 = smul.addr %s618, 2
      %s622 = sadd.s32 %s620, %s621
      %s623 = smul.addr %s622, 8
      %s624 = scalar_lea.vmem %s5, %s623
      // Predicated region
      $region37: #{tpu_custom_call.1} parent=35 // pred_check
        %p625 = pneg %p140
      $region38: #{tpu_custom_call.1} parent=35 // pred_check_branch
        %627 = sbr.rel (%p625) target = $region40
      $region39: #{tpu_custom_call.1} parent=35 // pred_region
        _
      $region40: #{tpu_custom_call.1} parent=35 // pred_fallthru
        _
      // Predicated region
      $region41: #{tpu_custom_call.1} parent=35 // pred_check
        %p628 = pneg %p168
      $region42: #{tpu_custom_call.1} parent=35 // pred_check_branch
        %630 = sbr.rel (%p628) target = $region44
      $region43: #{tpu_custom_call.1} parent=35 // pred_region
        _
      $region44: #{tpu_custom_call.1} parent=35 // pred_fallthru
        _
    $region36: #{tpu_custom_call.1} parent=5 // pred_fallthru
      _
    %p631 = scmp.le.s32.totalorder 2, %s12
    // Predicated region
    $region45: #{tpu_custom_call.1} parent=5 // pred_check
      %p632 = pneg %p631
    $region46: #{tpu_custom_call.1} parent=5 // pred_check_branch
      %634 = sbr.rel (%p632) target = $region48
    $region47: #{tpu_custom_call.1} parent=5 // pred_region
      %s635 = ssub.s32 %s12, 2
      // Predicated region
      $region49: #{tpu_custom_call.1} parent=47 // pred_check
        %p636 = pneg %p146
      $region50: #{tpu_custom_call.1} parent=47 // pred_check_branch
        %638 = sbr.rel (%p636) target = $region52
      $region51: #{tpu_custom_call.1} parent=47 // pred_region
        %p639 = scmp.lt.s32.totalorder %s23, 1
        %s640 = scalar_select %p639, %s23, 1
        %p641 = scmp.lt.s32.totalorder %s24, 0
        %s642 = scalar_select %p641, %s24, 0
        %s643 = smul.addr %s640, 2
        %s644 = sadd.s32 %s642, %s643
        %s645 = smul.addr %s644, 8
        %s646 = scalar_lea.vmem %s4, %s645
      $region52: #{tpu_custom_call.1} parent=47 // pred_fallthru
        _
      // Predicated region
      $region53: #{tpu_custom_call.1} parent=47 // pred_check
        %p647 = pneg %p174
      $region54: #{tpu_custom_call.1} parent=47 // pred_check_branch
        %649 = sbr.rel (%p647) target = $region56
      $region55: #{tpu_custom_call.1} parent=47 // pred_region
        %p650 = scmp.lt.s32.totalorder %s23, 1
        %s651 = scalar_select %p650, %s23, 1
        %p652 = scmp.lt.s32.totalorder %s24, 0
        %s653 = scalar_select %p652, %s24, 0
        %s654 = smul.addr %s651, 2
        %s655 = sadd.s32 %s653, %s654
        %s656 = smul.addr %s655, 8
        %s657 = scalar_lea.vmem %s5, %s656
      $region56: #{tpu_custom_call.1} parent=47 // pred_fallthru
        _
    $region48: #{tpu_custom_call.1} parent=5 // pred_fallthru
      _
  $region6: #{tpu_custom_call.1} parent=0 // loop_footer
    %s16 = sadd.s32 1, %s12
  $region7: #{tpu_custom_call.1} parent=0 // loop_footer_branch
    %11 = sbr.rel target = $region3
  $region8: #{tpu_custom_call.1} parent=0 // loop_exit
    _

</llo_original>
